<compile_context>
chip_gen: v7x
topology: tpu7x:2x2x1
jax: 0.10.0
libtpu: 0.0.40
codegen_flags: <defaults>
</compile_context>

<pallas_src>
import jax
import jax.numpy as jnp
from jax.experimental import pallas as pl
from jax.experimental.pallas import tpu as pltpu

IN_F = 28 * 28      # 784
HID = 200
OUT_F = 10
OUT_PAD = 128       # lane-dense padded output width


# ----------------------------- Pallas kernel --------------------------------
def mlp_kernel(x_ref, w1_ref, b1_ref, w2_ref, b2_ref, w3_ref, b3_ref, o_ref):
    # x_ref : (TB, 784) bf16    w1_ref: (784, 200) bf16   b1_ref: (1, 200) f32
    # w2_ref: (200, 200) bf16   b2_ref: (1, 200) f32
    # w3_ref: (200, 128) bf16   b3_ref: (1, 128) f32
    # o_ref : (TB, 128) f32
    x = x_ref[...]
    h1 = jnp.dot(x, w1_ref[...], preferred_element_type=jnp.float32) + b1_ref[...]
    h1 = jnp.maximum(h1, 0.0).astype(jnp.bfloat16)          # ReLU
    h2 = jnp.dot(h1, w2_ref[...], preferred_element_type=jnp.float32) + b2_ref[...]
    h2 = jnp.maximum(h2, 0.0).astype(jnp.bfloat16)          # ReLU
    out = jnp.dot(h2, w3_ref[...], preferred_element_type=jnp.float32) + b3_ref[...]
    o_ref[...] = out.astype(o_ref.dtype)


# --------------------- one-time parameter preparation ------------------------
def prepare_params(params):
    """Fold prune masks, transpose to (in, out), cast to bf16, pad layer 3.

    Call once per parameter update; keeps the mask-fold/transpose out of the
    per-forward hot path.
    """
    w1 = (params["w1"] * params["m1"]).T.astype(jnp.bfloat16)            # (784, 200)
    w2 = (params["w2"] * params["m2"]).T.astype(jnp.bfloat16)            # (200, 200)
    w3m = (params["w3"] * params["m3"]).T                                # (200, 10) f32
    w3 = jnp.zeros((HID, OUT_PAD), jnp.float32).at[:, :OUT_F].set(w3m)
    w3 = w3.astype(jnp.bfloat16)                                         # (200, 128)
    b1 = params["b1"].reshape(1, -1).astype(jnp.float32)                 # (1, 200)
    b2 = params["b2"].reshape(1, -1).astype(jnp.float32)                 # (1, 200)
    b3 = jnp.zeros((1, OUT_PAD), jnp.float32).at[:, :OUT_F].set(
        params["b3"].reshape(1, -1))                                     # (1, 128)
    return dict(w1=w1, b1=b1, w2=w2, b2=b2, w3=w3, b3=b3)


# ------------------------------ forward wrapper ------------------------------
def mlp_forward(x_nchw, prepped):
    """x_nchw: (B, 1, 28, 28) float32. prepped: output of prepare_params."""
    B = x_nchw.shape[0]
    x_flat = x_nchw.reshape(B, -1).astype(jnp.bfloat16)      # == x.view(x.size(0), -1)

    # Batch tile: 256 rows for real batches (MXU-sized), small batches round
    # up to the 8-sublane granule so the block shape stays (8,128)-friendly.
    TB = 256 if B >= 256 else max(8, -(-B // 8) * 8)
    Bp = -(-B // TB) * TB                                    # pad batch to multiple of TB
    if Bp != B:
        x_flat = jnp.pad(x_flat, ((0, Bp - B), (0, 0)))

    w1, b1 = prepped["w1"], prepped["b1"]
    w2, b2 = prepped["w2"], prepped["b2"]
    w3, b3 = prepped["w3"], prepped["b3"]

    resident = lambda shape: pl.BlockSpec(shape, lambda i: (0, 0))

    flops = 2 * Bp * (IN_F * HID + HID * HID + HID * OUT_PAD)
    bytes_accessed = (
        x_flat.size * 2
        + (w1.size + w2.size + w3.size) * 2
        + (b1.size + b2.size + b3.size) * 4
        + Bp * OUT_PAD * 4
    )

    out = pl.pallas_call(
        mlp_kernel,
        out_shape=jax.ShapeDtypeStruct((Bp, OUT_PAD), jnp.float32),
        grid=(Bp // TB,),
        in_specs=[
            pl.BlockSpec((TB, IN_F), lambda i: (i, 0)),      # x: batch-tiled
            resident(w1.shape), resident(b1.shape),          # weights/biases resident
            resident(w2.shape), resident(b2.shape),
            resident(w3.shape), resident(b3.shape),
        ],
        out_specs=pl.BlockSpec((TB, OUT_PAD), lambda i: (i, 0)),
        compiler_params=pltpu.CompilerParams(
            dimension_semantics=("parallel",)),
        cost_estimate=pl.CostEstimate(
            flops=flops, transcendentals=0, bytes_accessed=bytes_accessed),
    )(x_flat, w1, b1, w2, b2, w3, b3)

    return out[:B, :OUT_F]                                   # drop batch/lane padding


# ------------------------- deterministic parameters --------------------------
def init_params(key):
    ks = jax.random.split(key, 7)
    # PyTorch nn.Linear default init: U(-1/sqrt(fan_in), 1/sqrt(fan_in)).
    def lin(k, out_f, in_f):
        bound = 1.0 / jnp.sqrt(in_f)
        kw, kb = jax.random.split(k)
        w = jax.random.uniform(kw, (out_f, in_f), jnp.float32, -bound, bound)
        b = jax.random.uniform(kb, (out_f,), jnp.float32, -bound, bound)
        return w, b

    w1, b1 = lin(ks[0], HID, IN_F)
    w2, b2 = lin(ks[1], HID, HID)
    w3, b3 = lin(ks[2], OUT_F, HID)
    # Deterministic binary prune masks (like set_masks([m0, m1, m2])).
    m1 = (jax.random.uniform(ks[3], (HID, IN_F)) > 0.3).astype(jnp.float32)
    m2 = (jax.random.uniform(ks[4], (HID, HID)) > 0.3).astype(jnp.float32)
    m3 = (jax.random.uniform(ks[5], (OUT_F, HID)) > 0.3).astype(jnp.float32)
    return dict(w1=w1, b1=b1, w2=w2, b2=b2, w3=w3, b3=b3, m1=m1, m2=m2, m3=m3)


def reference_forward(x_nchw, params):
    """Pure-JAX reference with the same bf16-weight / f32-accumulate recipe."""
    x = x_nchw.reshape(x_nchw.shape[0], -1).astype(jnp.bfloat16)
    w1 = (params["w1"] * params["m1"]).T.astype(jnp.bfloat16)
    w2 = (params["w2"] * params["m2"]).T.astype(jnp.bfloat16)
    w3 = (params["w3"] * params["m3"]).T.astype(jnp.bfloat16)
    h = jnp.dot(x, w1, preferred_element_type=jnp.float32) + params["b1"]
    h = jnp.maximum(h, 0.0).astype(jnp.bfloat16)
    h = jnp.dot(h, w2, preferred_element_type=jnp.float32) + params["b2"]
    h = jnp.maximum(h, 0.0).astype(jnp.bfloat16)
    return jnp.dot(h, w3, preferred_element_type=jnp.float32) + params["b3"]


if __name__ == "__main__":
    key = jax.random.PRNGKey(0)
    k_x, k_p = jax.random.split(key)
    B = 2
    x = jax.random.normal(k_x, (B, 1, 28, 28), jnp.float32)  # NCHW MNIST-like input
    params = init_params(k_p)
    prepped = prepare_params(params)

    out = mlp_forward(x, prepped)
    out = jax.block_until_ready(out)

    ref = reference_forward(x, params)
    assert out.shape == (B, OUT_F)
    assert jnp.allclose(out, ref, atol=2e-2, rtol=2e-2), "mismatch vs JAX reference"
    print("KERNEL_OK")
</pallas_src>

<mosaic_0001>
module attributes {stable_mosaic.version = 11 : i64} {
  func.func @mlp_kernel(%arg0: i32, %arg1: memref<8x784xbf16, #tpu.memory_space<vmem>>, %arg2: memref<784x200xbf16, #tpu.memory_space<vmem>>, %arg3: memref<1x200xf32, #tpu.memory_space<vmem>>, %arg4: memref<200x200xbf16, #tpu.memory_space<vmem>>, %arg5: memref<1x200xf32, #tpu.memory_space<vmem>>, %arg6: memref<200x128xbf16, #tpu.memory_space<vmem>>, %arg7: memref<1x128xf32, #tpu.memory_space<vmem>>, %arg8: memref<8x128xf32, #tpu.memory_space<vmem>>) attributes {dimension_semantics = [#tpu.dimension_semantics<parallel>], iteration_bounds = array<i64: 1>, scalar_prefetch = 0 : i64, scratch_operands = 0 : i64, tpu.core_type = #tpu.core_type<tc>, window_params = [{transform_indices = @transform_0, window_bounds = array<i64: 8, 784>}, {pipeline_mode = #tpu.pipeline_mode<synchronous>, transform_indices = @transform_1, window_bounds = array<i64: 784, 200>}, {pipeline_mode = #tpu.pipeline_mode<synchronous>, transform_indices = @transform_2, window_bounds = array<i64: 1, 200>}, {pipeline_mode = #tpu.pipeline_mode<synchronous>, transform_indices = @transform_3, window_bounds = array<i64: 200, 200>}, {pipeline_mode = #tpu.pipeline_mode<synchronous>, transform_indices = @transform_4, window_bounds = array<i64: 1, 200>}, {pipeline_mode = #tpu.pipeline_mode<synchronous>, transform_indices = @transform_5, window_bounds = array<i64: 200, 128>}, {pipeline_mode = #tpu.pipeline_mode<synchronous>, transform_indices = @transform_6, window_bounds = array<i64: 1, 128>}, {transform_indices = @transform_7, window_bounds = array<i64: 8, 128>}]} {
    %c0 = arith.constant 0 : index
    %c0_0 = arith.constant 0 : index
    %0 = vector.load %arg1[%c0, %c0_0] : memref<8x784xbf16, #tpu.memory_space<vmem>>, vector<8x784xbf16>
    %c0_1 = arith.constant 0 : index
    %c0_2 = arith.constant 0 : index
    %1 = vector.load %arg2[%c0_1, %c0_2] : memref<784x200xbf16, #tpu.memory_space<vmem>>, vector<784x200xbf16>
    %cst = arith.constant dense<0.000000e+00> : vector<8x200xf32>
    %2 = tpu.matmul %0, %1, %cst {dimension_numbers = #tpu.dot_dimension_numbers<[1], [0], [0], [1], [0, 0, 1, 1], [], []>} : vector<8x784xbf16>, vector<784x200xbf16>, vector<8x200xf32> -> vector<8x200xf32>
    %c0_3 = arith.constant 0 : index
    %c0_4 = arith.constant 0 : index
    %3 = vector.load %arg3[%c0_3, %c0_4] : memref<1x200xf32, #tpu.memory_space<vmem>>, vector<1x200xf32>
    %4 = vector.broadcast %3 : vector<1x200xf32> to vector<8x200xf32>
    %5 = arith.addf %2, %4 : vector<8x200xf32>
    %cst_5 = arith.constant 0.000000e+00 : f32
    %6 = vector.broadcast %cst_5 : f32 to vector<8x200xf32>
    %7 = arith.maximumf %5, %6 : vector<8x200xf32>
    %8 = arith.truncf %7 : vector<8x200xf32> to vector<8x200xbf16>
    %c0_6 = arith.constant 0 : index
    %c0_7 = arith.constant 0 : index
    %9 = vector.load %arg4[%c0_6, %c0_7] : memref<200x200xbf16, #tpu.memory_space<vmem>>, vector<200x200xbf16>
    %cst_8 = arith.constant dense<0.000000e+00> : vector<8x200xf32>
    %10 = tpu.matmul %8, %9, %cst_8 {dimension_numbers = #tpu.dot_dimension_numbers<[1], [0], [0], [1], [0, 0, 1, 1], [], []>} : vector<8x200xbf16>, vector<200x200xbf16>, vector<8x200xf32> -> vector<8x200xf32>
    %c0_9 = arith.constant 0 : index
    %c0_10 = arith.constant 0 : index
    %11 = vector.load %arg5[%c0_9, %c0_10] : memref<1x200xf32, #tpu.memory_space<vmem>>, vector<1x200xf32>
    %12 = vector.broadcast %11 : vector<1x200xf32> to vector<8x200xf32>
    %13 = arith.addf %10, %12 : vector<8x200xf32>
    %cst_11 = arith.constant 0.000000e+00 : f32
    %14 = vector.broadcast %cst_11 : f32 to vector<8x200xf32>
    %15 = arith.maximumf %13, %14 : vector<8x200xf32>
    %16 = arith.truncf %15 : vector<8x200xf32> to vector<8x200xbf16>
    %c0_12 = arith.constant 0 : index
    %c0_13 = arith.constant 0 : index
    %17 = vector.load %arg6[%c0_12, %c0_13] : memref<200x128xbf16, #tpu.memory_space<vmem>>, vector<200x128xbf16>
    %cst_14 = arith.constant dense<0.000000e+00> : vector<8x128xf32>
    %18 = tpu.matmul %16, %17, %cst_14 {dimension_numbers = #tpu.dot_dimension_numbers<[1], [0], [0], [1], [0, 0, 1, 1], [], []>} : vector<8x200xbf16>, vector<200x128xbf16>, vector<8x128xf32> -> vector<8x128xf32>
    %c0_15 = arith.constant 0 : index
    %c0_16 = arith.constant 0 : index
    %19 = vector.load %arg7[%c0_15, %c0_16] : memref<1x128xf32, #tpu.memory_space<vmem>>, vector<1x128xf32>
    %20 = vector.broadcast %19 : vector<1x128xf32> to vector<8x128xf32>
    %21 = arith.addf %18, %20 : vector<8x128xf32>
    %c0_17 = arith.constant 0 : index
    %c0_18 = arith.constant 0 : index
    %22 = vector.load %arg8[%c0_17, %c0_18] : memref<8x128xf32, #tpu.memory_space<vmem>>, vector<8x128xf32>
    tpu.vector_store %arg8[%c0_17, %c0_18], %21 {strides = array<i32>} : memref<8x128xf32, #tpu.memory_space<vmem>>, vector<8x128xf32>,
    return
  }
  func.func @transform_0(%arg0: i32) -> (i32, i32) {
    %c0_i32 = arith.constant 0 : i32
    %c0_i32_0 = arith.constant 0 : i32
    return %arg0, %c0_i32 : i32, i32
  }
  func.func @transform_1(%arg0: i32) -> (i32, i32) {
    %c0_i32 = arith.constant 0 : i32
    %c0_i32_0 = arith.constant 0 : i32
    %c0_i32_1 = arith.constant 0 : i32
    return %c0_i32, %c0_i32_0 : i32, i32
  }
  func.func @transform_2(%arg0: i32) -> (i32, i32) {
    %c0_i32 = arith.constant 0 : i32
    %c0_i32_0 = arith.constant 0 : i32
    %c0_i32_1 = arith.constant 0 : i32
    return %c0_i32, %c0_i32_0 : i32, i32
  }
  func.func @transform_3(%arg0: i32) -> (i32, i32) {
    %c0_i32 = arith.constant 0 : i32
    %c0_i32_0 = arith.constant 0 : i32
    %c0_i32_1 = arith.constant 0 : i32
    return %c0_i32, %c0_i32_0 : i32, i32
  }
  func.func @transform_4(%arg0: i32) -> (i32, i32) {
    %c0_i32 = arith.constant 0 : i32
    %c0_i32_0 = arith.constant 0 : i32
    %c0_i32_1 = arith.constant 0 : i32
    return %c0_i32, %c0_i32_0 : i32, i32
  }
  func.func @transform_5(%arg0: i32) -> (i32, i32) {
    %c0_i32 = arith.constant 0 : i32
    %c0_i32_0 = arith.constant 0 : i32
    %c0_i32_1 = arith.constant 0 : i32
    return %c0_i32, %c0_i32_0 : i32, i32
  }
  func.func @transform_6(%arg0: i32) -> (i32, i32) {
    %c0_i32 = arith.constant 0 : i32
    %c0_i32_0 = arith.constant 0 : i32
    %c0_i32_1 = arith.constant 0 : i32
    return %c0_i32, %c0_i32_0 : i32, i32
  }
  func.func @transform_7(%arg0: i32) -> (i32, i32) {
    %c0_i32 = arith.constant 0 : i32
    %c0_i32_0 = arith.constant 0 : i32
    return %arg0, %c0_i32 : i32, i32
  }
}

</mosaic_0001>

<llo_original>
// kernel: tpu_custom_call.1
$region0: #{tpu_custom_call.1}
  #allocation0 [shape = 'u32[]', space=smem, size = 0x4, offset = 0x4, fixed_abs, tag = 'smem constant byte address 0x4 - core index']
  #allocation1 [shape = 'u32[144,128]{1,0:T(1,128)}', space=vmem, size = 0x12000, scoped, tag = 'internal scratch']
  %s0 = inlined_call_operand.vmem [shape: bf16[8,784], index: 0, kind: input, shape index: {}]
  %s1 = inlined_call_operand.vmem [shape: bf16[784,200], index: 1, kind: input, shape index: {}]
  %s2 = inlined_call_operand.vmem [shape: f32[1,200], index: 2, kind: input, shape index: {}]
  %s3 = inlined_call_operand.vmem [shape: bf16[200,200], index: 3, kind: input, shape index: {}]
  %s4 = inlined_call_operand.vmem [shape: f32[1,200], index: 4, kind: input, shape index: {}]
  %s5 = inlined_call_operand.vmem [shape: bf16[200,128], index: 5, kind: input, shape index: {}]
  %s6 = inlined_call_operand.vmem [shape: f32[1,128], index: 6, kind: input, shape index: {}]
  %s7 = inlined_call_operand.hbm [shape: f32[8,128], index: 7, kind: output, shape index: {}]
  %s8 = sld [smem:[#allocation0]]
  $region38: #{tpu_custom_call.1} parent=0
    _
  %s10 = ssub.s32 1, %s8
  %s11 = scalar_select 0, %s10, %s8
  $region1: #{tpu_custom_call.1} parent=0
    #allocation2 [shape = 'u8[4096]{0}', space=vmem, size = 0x1000, scoped, tag = 'output window, operand 0, single buffered']
    #allocation3 [shape = 's32[1]{0}', space=sflag, size = 0x4, scoped, tag = 'scoped memory for tpu_custom_call.1']
    %12 = vsyncpa [#allocation3], 0
    // Predicated region
    $region2: #{tpu_custom_call.1} parent=1 // pred_check
      _
    $region3: #{tpu_custom_call.1} parent=1 // pred_check_branch
      %14 = sbr.rel (0) target = $region5
    $region4: #{tpu_custom_call.1} parent=1 // pred_region
      _
    $region5: #{tpu_custom_call.1} parent=1 // pred_fallthru
      _
    // Predicated region
    $region6: #{tpu_custom_call.1} parent=1 // pred_check
      _
    $region7: #{tpu_custom_call.1} parent=1 // pred_check_branch
      %16 = sbr.rel (0) target = $region9
    $region8: #{tpu_custom_call.1} parent=1 // pred_region
      _
    $region9: #{tpu_custom_call.1} parent=1 // pred_fallthru
      _
    // Predicated region
    $region10: #{tpu_custom_call.1} parent=1 // pred_check
      _
    $region11: #{tpu_custom_call.1} parent=1 // pred_check_branch
      %18 = sbr.rel (0) target = $region13
    $region12: #{tpu_custom_call.1} parent=1 // pred_region
      _
    $region13: #{tpu_custom_call.1} parent=1 // pred_fallthru
      _
    // Predicated region
    $region14: #{tpu_custom_call.1} parent=1 // pred_check
      _
    $region15: #{tpu_custom_call.1} parent=1 // pred_check_branch
      %20 = sbr.rel (0) target = $region17
    $region16: #{tpu_custom_call.1} parent=1 // pred_region
      _
    $region17: #{tpu_custom_call.1} parent=1 // pred_fallthru
      _
    // Predicated region
    $region18: #{tpu_custom_call.1} parent=1 // pred_check
      _
    $region19: #{tpu_custom_call.1} parent=1 // pred_check_branch
      %22 = sbr.rel (0) target = $region21
    $region20: #{tpu_custom_call.1} parent=1 // pred_region
      _
    $region21: #{tpu_custom_call.1} parent=1 // pred_fallthru
      _
    // Predicated region
    $region22: #{tpu_custom_call.1} parent=1 // pred_check
      _
    $region23: #{tpu_custom_call.1} parent=1 // pred_check_branch
      %24 = sbr.rel (0) target = $region25
    $region24: #{tpu_custom_call.1} parent=1 // pred_region
      _
    $region25: #{tpu_custom_call.1} parent=1 // pred_fallthru
      _
    // Predicated region
    $region26: #{tpu_custom_call.1} parent=1 // pred_check
      _
    $region27: #{tpu_custom_call.1} parent=1 // pred_check_branch
      %26 = sbr.rel (0) target = $region29
    $region28: #{tpu_custom_call.1} parent=1 // pred_region
      _
    $region29: #{tpu_custom_call.1} parent=1 // pred_fallthru
      _
    %v28 = vld [vmem:[%s0] sm:$0xff]
    %v29 = vld [vmem:[%s0 + $0x8] sm:$0xff]
    %v30 = vld [vmem:[%s0 + $0x10] sm:$0xff]
    %v31 = vld [vmem:[%s0 + $0x18] sm:$0xf]
    %v32 = vld [vmem:[%s1] sm:$0xff]
    %v33 = vld [vmem:[%s1 + $0x8] sm:$0xff]
    %v34 = vld [vmem:[%s1 + $0x10] sm:$0xff]
    %v35 = vld [vmem:[%s1 + $0x18] sm:$0xff]
    %v36 = vld [vmem:[%s1 + $0x20] sm:$0xff]
    %v37 = vld [vmem:[%s1 + $0x28] sm:$0xff]
    %v38 = vld [vmem:[%s1 + $0x30] sm:$0xff]
    %v39 = vld [vmem:[%s1 + $0x38] sm:$0xff]
    %v40 = vld [vmem:[%s1 + $0x40] sm:$0xff]
    %v41 = vld [vmem:[%s1 + $0x48] sm:$0xff]
    %v42 = vld [vmem:[%s1 + $0x50] sm:$0xff]
    %v43 = vld [vmem:[%s1 + $0x58] sm:$0xff]
    %v44 = vld [vmem:[%s1 + $0x60] sm:$0xff]
    %v45 = vld [vmem:[%s1 + $0x68] sm:$0xff]
    %v46 = vld [vmem:[%s1 + $0x70] sm:$0xff]
    %v47 = vld [vmem:[%s1 + $0x78] sm:$0xff]
    %v48 = vld [vmem:[%s1 + $0x80] sm:$0xff]
    %v49 = vld [vmem:[%s1 + $0x88] sm:$0xff]
    %v50 = vld [vmem:[%s1 + $0x90] sm:$0xff]
    %v51 = vld [vmem:[%s1 + $0x98] sm:$0xff]
    %v52 = vld [vmem:[%s1 + $0xa0] sm:$0xff]
    %v53 = vld [vmem:[%s1 + $0xa8] sm:$0xff]
    %v54 = vld [vmem:[%s1 + $0xb0] sm:$0xff]
    %v55 = vld [vmem:[%s1 + $0xb8] sm:$0xff]
    %v56 = vld [vmem:[%s1 + $0xc0] sm:$0xff]
    %v57 = vld [vmem:[%s1 + $0xc8] sm:$0xff]
    %v58 = vld [vmem:[%s1 + $0xd0] sm:$0xff]
    %v59 = vld [vmem:[%s1 + $0xd8] sm:$0xff]
    %v60 = vld [vmem:[%s1 + $0xe0] sm:$0xff]
    %v61 = vld [vmem:[%s1 + $0xe8] sm:$0xff]
    %v62 = vld [vmem:[%s1 + $0xf0] sm:$0xff]
    %v63 = vld [vmem:[%s1 + $0xf8] sm:$0xff]
    %v64 = vld [vmem:[%s1 + $0x100] sm:$0xff]
    %v65 = vld [vmem:[%s1 + $0x108] sm:$0xff]
    %v66 = vld [vmem:[%s1 + $0x110] sm:$0xff]
    %v67 = vld [vmem:[%s1 + $0x118] sm:$0xff]
    %v68 = vld [vmem:[%s1 + $0x120] sm:$0xff]
    %v69 = vld [vmem:[%s1 + $0x128] sm:$0xff]
    %v70 = vld [vmem:[%s1 + $0x130] sm:$0xff]
    %v71 = vld [vmem:[%s1 + $0x138] sm:$0xff]
    %v72 = vld [vmem:[%s1 + $0x140] sm:$0xff]
    %v73 = vld [vmem:[%s1 + $0x148] sm:$0xff]
    %v74 = vld [vmem:[%s1 + $0x150] sm:$0xff]
    %v75 = vld [vmem:[%s1 + $0x158] sm:$0xff]
    %v76 = vld [vmem:[%s1 + $0x160] sm:$0xff]
    %v77 = vld [vmem:[%s1 + $0x168] sm:$0xff]
    %v78 = vld [vmem:[%s1 + $0x170] sm:$0xff]
    %v79 = vld [vmem:[%s1 + $0x178] sm:$0xff]
    %v80 = vld [vmem:[%s1 + $0x180] sm:$0xff]
    %v81 = vld [vmem:[%s1 + $0x188] sm:$0xff]
    %v82 = vld [vmem:[%s1 + $0x190] sm:$0xff]
    %v83 = vld [vmem:[%s1 + $0x198] sm:$0xff]
    %v84 = vld [vmem:[%s1 + $0x1a0] sm:$0xff]
    %v85 = vld [vmem:[%s1 + $0x1a8] sm:$0xff]
    %v86 = vld [vmem:[%s1 + $0x1b0] sm:$0xff]
    %v87 = vld [vmem:[%s1 + $0x1b8] sm:$0xff]
    %v88 = vld [vmem:[%s1 + $0x1c0] sm:$0xff]
    %v89 = vld [vmem:[%s1 + $0x1c8] sm:$0xff]
    %v90 = vld [vmem:[%s1 + $0x1d0] sm:$0xff]
    %v91 = vld [vmem:[%s1 + $0x1d8] sm:$0xff]
    %v92 = vld [vmem:[%s1 + $0x1e0] sm:$0xff]
    %v93 = vld [vmem:[%s1 + $0x1e8] sm:$0xff]
    %v94 = vld [vmem:[%s1 + $0x1f0] sm:$0xff]
    %v95 = vld [vmem:[%s1 + $0x1f8] sm:$0xff]
    %v96 = vld [vmem:[%s1 + $0x200] sm:$0xff]
    %v97 = vld [vmem:[%s1 + $0x208] sm:$0xff]
    %v98 = vld [vmem:[%s1 + $0x210] sm:$0xff]
    %v99 = vld [vmem:[%s1 + $0x218] sm:$0xff]
    %v100 = vld [vmem:[%s1 + $0x220] sm:$0xff]
    %v101 = vld [vmem:[%s1 + $0x228] sm:$0xff]
    %v102 = vld [vmem:[%s1 + $0x230] sm:$0xff]
    %v103 = vld [vmem:[%s1 + $0x238] sm:$0xff]
    %v104 = vld [vmem:[%s1 + $0x240] sm:$0xff]
    %v105 = vld [vmem:[%s1 + $0x248] sm:$0xff]
    %v106 = vld [vmem:[%s1 + $0x250] sm:$0xff]
    %v107 = vld [vmem:[%s1 + $0x258] sm:$0xff]
    %v108 = vld [vmem:[%s1 + $0x260] sm:$0xff]
    %v109 = vld [vmem:[%s1 + $0x268] sm:$0xff]
    %v110 = vld [vmem:[%s1 + $0x270] sm:$0xff]
    %v111 = vld [vmem:[%s1 + $0x278] sm:$0xff]
    %v112 = vld [vmem:[%s1 + $0x280] sm:$0xff]
    %v113 = vld [vmem:[%s1 + $0x288] sm:$0xff]
    %v114 = vld [vmem:[%s1 + $0x290] sm:$0xff]
    %v115 = vld [vmem:[%s1 + $0x298] sm:$0xff]
    %v116 = vld [vmem:[%s1 + $0x2a0] sm:$0xff]
    %v117 = vld [vmem:[%s1 + $0x2a8] sm:$0xff]
    %v118 = vld [vmem:[%s1 + $0x2b0] sm:$0xff]
    %v119 = vld [vmem:[%s1 + $0x2b8] sm:$0xff]
    %v120 = vld [vmem:[%s1 + $0x2c0] sm:$0xff]
    %v121 = vld [vmem:[%s1 + $0x2c8] sm:$0xff]
    %v122 = vld [vmem:[%s1 + $0x2d0] sm:$0xff]
    %v123 = vld [vmem:[%s1 + $0x2d8] sm:$0xff]
    %v124 = vld [vmem:[%s1 + $0x2e0] sm:$0xff]
    %v125 = vld [vmem:[%s1 + $0x2e8] sm:$0xff]
    %v126 = vld [vmem:[%s1 + $0x2f0] sm:$0xff]
    %v127 = vld [vmem:[%s1 + $0x2f8] sm:$0xff]
    %v128 = vld [vmem:[%s1 + $0x300] sm:$0xff]
    %v129 = vld [vmem:[%s1 + $0x308] sm:$0xff]
    %v130 = vld [vmem:[%s2] sm:$0x3]
    %v132 = vlaneseq
    %v133 = vshrl.u32 %v132, 7
    %v134 = vsub.s32 0, %v133
    %v135 = vrot.slane %v130, %v134
    %v136 = vlaneseq
    %v137 = vshrl.u32 %v136, 7
    %v138 = vsub.s32 1, %v137
    %v139 = vrot.slane %v130, %v138
    %v146 = vunpack.c.l.b16 %v28
    %v147 = vunpack.c.h.b16 %v28
    %v148 = vunpack.c.l.b16 %v29
    %v149 = vunpack.c.h.b16 %v29
    %v150 = vunpack.c.l.b16 %v30
    %v151 = vunpack.c.h.b16 %v30
    %v152 = vunpack.c.l.b16 %v31
    %v153 = vpack.c.b16 %v146, %v146
    %v154 = vpack.c.b16 %v147, %v147
    %v155 = vpack.c.b16 %v148, %v148
    %v156 = vpack.c.b16 %v149, %v149
    %v157 = vpack.c.b16 %v150, %v150
    %v158 = vpack.c.b16 %v151, %v151
    %v159 = vpack.c.b16 %v152, %v152
    %v264 = vunpack.c.l.b16 %v32
    %v265 = vunpack.c.h.b16 %v32
    %v266 = vunpack.c.l.b16 %v33
    %v267 = vunpack.c.h.b16 %v33
    %v268 = vunpack.c.l.b16 %v34
    %v269 = vunpack.c.h.b16 %v34
    %v270 = vunpack.c.l.b16 %v35
    %v271 = vunpack.c.h.b16 %v35
    %v272 = vunpack.c.l.b16 %v36
    %v273 = vunpack.c.h.b16 %v36
    %v274 = vunpack.c.l.b16 %v37
    %v275 = vunpack.c.h.b16 %v37
    %v276 = vunpack.c.l.b16 %v38
    %v277 = vunpack.c.h.b16 %v38
    %v278 = vunpack.c.l.b16 %v39
    %v279 = vunpack.c.h.b16 %v39
    %v280 = vunpack.c.l.b16 %v40
    %v281 = vunpack.c.h.b16 %v40
    %v282 = vunpack.c.l.b16 %v41
    %v283 = vunpack.c.h.b16 %v41
    %v284 = vunpack.c.l.b16 %v42
    %v285 = vunpack.c.h.b16 %v42
    %v286 = vunpack.c.l.b16 %v43
    %v287 = vunpack.c.h.b16 %v43
    %v288 = vunpack.c.l.b16 %v44
    %v289 = vunpack.c.h.b16 %v44
    %v290 = vunpack.c.l.b16 %v45
    %v291 = vunpack.c.h.b16 %v45
    %v292 = vunpack.c.l.b16 %v46
    %v293 = vunpack.c.h.b16 %v46
    %v294 = vunpack.c.l.b16 %v47
    %v295 = vunpack.c.h.b16 %v47
    %v296 = vunpack.c.l.b16 %v48
    %v297 = vunpack.c.h.b16 %v48
    %v298 = vunpack.c.l.b16 %v49
    %v299 = vunpack.c.h.b16 %v49
    %v300 = vunpack.c.l.b16 %v50
    %v301 = vunpack.c.h.b16 %v50
    %v302 = vunpack.c.l.b16 %v51
    %v303 = vunpack.c.h.b16 %v51
    %v304 = vunpack.c.l.b16 %v52
    %v305 = vunpack.c.h.b16 %v52
    %v306 = vunpack.c.l.b16 %v53
    %v307 = vunpack.c.h.b16 %v53
    %v308 = vunpack.c.l.b16 %v54
    %v309 = vunpack.c.h.b16 %v54
    %v310 = vunpack.c.l.b16 %v55
    %v311 = vunpack.c.h.b16 %v55
    %v312 = vunpack.c.l.b16 %v56
    %v313 = vunpack.c.h.b16 %v56
    %v314 = vunpack.c.l.b16 %v57
    %v315 = vunpack.c.h.b16 %v57
    %v316 = vunpack.c.l.b16 %v58
    %v317 = vunpack.c.h.b16 %v58
    %v318 = vunpack.c.l.b16 %v59
    %v319 = vunpack.c.h.b16 %v59
    %v320 = vunpack.c.l.b16 %v60
    %v321 = vunpack.c.h.b16 %v60
    %v322 = vunpack.c.l.b16 %v61
    %v323 = vunpack.c.h.b16 %v61
    %v324 = vunpack.c.l.b16 %v62
    %v325 = vunpack.c.h.b16 %v62
    %v326 = vunpack.c.l.b16 %v63
    %v327 = vunpack.c.h.b16 %v63
    %v328 = vunpack.c.l.b16 %v64
    %v329 = vunpack.c.h.b16 %v64
    %v330 = vunpack.c.l.b16 %v65
    %v331 = vunpack.c.h.b16 %v65
    %v332 = vunpack.c.l.b16 %v66
    %v333 = vunpack.c.h.b16 %v66
    %v334 = vunpack.c.l.b16 %v67
    %v335 = vunpack.c.h.b16 %v67
    %v336 = vunpack.c.l.b16 %v68
    %v337 = vunpack.c.h.b16 %v68
    %v338 = vunpack.c.l.b16 %v69
    %v339 = vunpack.c.h.b16 %v69
    %v340 = vunpack.c.l.b16 %v70
    %v341 = vunpack.c.h.b16 %v70
    %v342 = vunpack.c.l.b16 %v71
    %v343 = vunpack.c.h.b16 %v71
    %v344 = vunpack.c.l.b16 %v72
    %v345 = vunpack.c.h.b16 %v72
    %v346 = vunpack.c.l.b16 %v73
    %v347 = vunpack.c.h.b16 %v73
    %v348 = vunpack.c.l.b16 %v74
    %v349 = vunpack.c.h.b16 %v74
    %v350 = vunpack.c.l.b16 %v75
    %v351 = vunpack.c.h.b16 %v75
    %v352 = vunpack.c.l.b16 %v76
    %v353 = vunpack.c.h.b16 %v76
    %v354 = vunpack.c.l.b16 %v77
    %v355 = vunpack.c.h.b16 %v77
    %v356 = vunpack.c.l.b16 %v78
    %v357 = vunpack.c.h.b16 %v78
    %v358 = vunpack.c.l.b16 %v79
    %v359 = vunpack.c.h.b16 %v79
    %v360 = vunpack.c.l.b16 %v80
    %v361 = vunpack.c.h.b16 %v80
    %v362 = vunpack.c.l.b16 %v81
    %v363 = vunpack.c.h.b16 %v81
    %v364 = vunpack.c.l.b16 %v82
    %v365 = vunpack.c.h.b16 %v82
    %v366 = vunpack.c.l.b16 %v83
    %v367 = vunpack.c.h.b16 %v83
    %v368 = vunpack.c.l.b16 %v84
    %v369 = vunpack.c.h.b16 %v84
    %v370 = vunpack.c.l.b16 %v85
    %v371 = vunpack.c.h.b16 %v85
    %v372 = vunpack.c.l.b16 %v86
    %v373 = vunpack.c.h.b16 %v86
    %v374 = vunpack.c.l.b16 %v87
    %v375 = vunpack.c.h.b16 %v87
    %v376 = vunpack.c.l.b16 %v88
    %v377 = vunpack.c.h.b16 %v88
    %v378 = vunpack.c.l.b16 %v89
    %v379 = vunpack.c.h.b16 %v89
    %v380 = vunpack.c.l.b16 %v90
    %v381 = vunpack.c.h.b16 %v90
    %v382 = vunpack.c.l.b16 %v91
    %v383 = vunpack.c.h.b16 %v91
    %v384 = vunpack.c.l.b16 %v92
    %v385 = vunpack.c.h.b16 %v92
    %v386 = vunpack.c.l.b16 %v93
    %v387 = vunpack.c.h.b16 %v93
    %v388 = vunpack.c.l.b16 %v94
    %v389 = vunpack.c.h.b16 %v94
    %v390 = vunpack.c.l.b16 %v95
    %v391 = vunpack.c.h.b16 %v95
    %v392 = vunpack.c.l.b16 %v96
    %v393 = vunpack.c.h.b16 %v96
    %v394 = vunpack.c.l.b16 %v97
    %v395 = vunpack.c.h.b16 %v97
    %v396 = vunpack.c.l.b16 %v98
    %v397 = vunpack.c.h.b16 %v98
    %v398 = vunpack.c.l.b16 %v99
    %v399 = vunpack.c.h.b16 %v99
    %v400 = vunpack.c.l.b16 %v100
    %v401 = vunpack.c.h.b16 %v100
    %v402 = vunpack.c.l.b16 %v101
    %v403 = vunpack.c.h.b16 %v101
    %v404 = vunpack.c.l.b16 %v102
    %v405 = vunpack.c.h.b16 %v102
    %v406 = vunpack.c.l.b16 %v103
    %v407 = vunpack.c.h.b16 %v103
    %v408 = vunpack.c.l.b16 %v104
    %v409 = vunpack.c.h.b16 %v104
    %v410 = vunpack.c.l.b16 %v105
    %v411 = vunpack.c.h.b16 %v105
    %v412 = vunpack.c.l.b16 %v106
    %v413 = vunpack.c.h.b16 %v106
    %v414 = vunpack.c.l.b16 %v107
    %v415 = vunpack.c.h.b16 %v107
    %v416 = vunpack.c.l.b16 %v108
    %v417 = vunpack.c.h.b16 %v108
    %v418 = vunpack.c.l.b16 %v109
    %v419 = vunpack.c.h.b16 %v109
    %v420 = vunpack.c.l.b16 %v110
    %v421 = vunpack.c.h.b16 %v110
    %v422 = vunpack.c.l.b16 %v111
    %v423 = vunpack.c.h.b16 %v111
    %v424 = vunpack.c.l.b16 %v112
    %v425 = vunpack.c.h.b16 %v112
    %v426 = vunpack.c.l.b16 %v113
    %v427 = vunpack.c.h.b16 %v113
    %v428 = vunpack.c.l.b16 %v114
    %v429 = vunpack.c.h.b16 %v114
    %v430 = vunpack.c.l.b16 %v115
    %v431 = vunpack.c.h.b16 %v115
    %v432 = vunpack.c.l.b16 %v116
    %v433 = vunpack.c.h.b16 %v116
    %v434 = vunpack.c.l.b16 %v117
    %v435 = vunpack.c.h.b16 %v117
    %v436 = vunpack.c.l.b16 %v118
    %v437 = vunpack.c.h.b16 %v118
    %v438 = vunpack.c.l.b16 %v119
    %v439 = vunpack.c.h.b16 %v119
    %v440 = vunpack.c.l.b16 %v120
    %v441 = vunpack.c.h.b16 %v120
    %v442 = vunpack.c.l.b16 %v121
    %v443 = vunpack.c.h.b16 %v121
    %v444 = vunpack.c.l.b16 %v122
    %v445 = vunpack.c.h.b16 %v122
    %v446 = vunpack.c.l.b16 %v123
    %v447 = vunpack.c.h.b16 %v123
    %v448 = vunpack.c.l.b16 %v124
    %v449 = vunpack.c.h.b16 %v124
    %v450 = vunpack.c.l.b16 %v125
    %v451 = vunpack.c.h.b16 %v125
    %v452 = vunpack.c.l.b16 %v126
    %v453 = vunpack.c.h.b16 %v126
    %v454 = vunpack.c.l.b16 %v127
    %v455 = vunpack.c.h.b16 %v127
    %v456 = vunpack.c.l.b16 %v128
    %v457 = vunpack.c.h.b16 %v128
    %v458 = vunpack.c.l.b16 %v129
    %v459 = vunpack.c.h.b16 %v129
    %v460 = vpack.c.b16 %v266, %v264
    %v461 = vpack.c.b16 %v267, %v265
    %v462 = vpack.c.b16 %v270, %v268
    %v463 = vpack.c.b16 %v271, %v269
    %v464 = vpack.c.b16 %v274, %v272
    %v465 = vpack.c.b16 %v275, %v273
    %v466 = vpack.c.b16 %v278, %v276
    %v467 = vpack.c.b16 %v279, %v277
    %v468 = vpack.c.b16 %v282, %v280
    %v469 = vpack.c.b16 %v283, %v281
    %v470 = vpack.c.b16 %v286, %v284
    %v471 = vpack.c.b16 %v287, %v285
    %v472 = vpack.c.b16 %v290, %v288
    %v473 = vpack.c.b16 %v291, %v289
    %v474 = vpack.c.b16 %v294, %v292
    %v475 = vpack.c.b16 %v295, %v293
    %v476 = vpack.c.b16 %v298, %v296
    %v477 = vpack.c.b16 %v299, %v297
    %v478 = vpack.c.b16 %v302, %v300
    %v479 = vpack.c.b16 %v303, %v301
    %v480 = vpack.c.b16 %v306, %v304
    %v481 = vpack.c.b16 %v307, %v305
    %v482 = vpack.c.b16 %v310, %v308
    %v483 = vpack.c.b16 %v311, %v309
    %v484 = vpack.c.b16 %v314, %v312
    %v485 = vpack.c.b16 %v315, %v313
    %v486 = vpack.c.b16 %v318, %v316
    %v487 = vpack.c.b16 %v319, %v317
    %v488 = vpack.c.b16 %v322, %v320
    %v489 = vpack.c.b16 %v323, %v321
    %v490 = vpack.c.b16 %v326, %v324
    %v491 = vpack.c.b16 %v327, %v325
    %v492 = vpack.c.b16 %v330, %v328
    %v493 = vpack.c.b16 %v331, %v329
    %v494 = vpack.c.b16 %v334, %v332
    %v495 = vpack.c.b16 %v335, %v333
    %v496 = vpack.c.b16 %v338, %v336
    %v497 = vpack.c.b16 %v339, %v337
    %v498 = vpack.c.b16 %v342, %v340
    %v499 = vpack.c.b16 %v343, %v341
    %v500 = vpack.c.b16 %v346, %v344
    %v501 = vpack.c.b16 %v347, %v345
    %v502 = vpack.c.b16 %v350, %v348
    %v503 = vpack.c.b16 %v351, %v349
    %v504 = vpack.c.b16 %v354, %v352
    %v505 = vpack.c.b16 %v355, %v353
    %v506 = vpack.c.b16 %v358, %v356
    %v507 = vpack.c.b16 %v359, %v357
    %v508 = vpack.c.b16 %v362, %v360
    %v509 = vpack.c.b16 %v363, %v361
    %v510 = vpack.c.b16 %v366, %v364
    %v511 = vpack.c.b16 %v367, %v365
    %v512 = vpack.c.b16 %v370, %v368
    %v513 = vpack.c.b16 %v371, %v369
    %v514 = vpack.c.b16 %v374, %v372
    %v515 = vpack.c.b16 %v375, %v373
    %v516 = vpack.c.b16 %v378, %v376
    %v517 = vpack.c.b16 %v379, %v377
    %v518 = vpack.c.b16 %v382, %v380
    %v519 = vpack.c.b16 %v383, %v381
    %v520 = vpack.c.b16 %v386, %v384
    %v521 = vpack.c.b16 %v387, %v385
    %v522 = vpack.c.b16 %v390, %v388
    %v523 = vpack.c.b16 %v391, %v389
    %v524 = vpack.c.b16 %v394, %v392
    %v525 = vpack.c.b16 %v395, %v393
    %v526 = vpack.c.b16 %v398, %v396
    %v527 = vpack.c.b16 %v399, %v397
    %v528 = vpack.c.b16 %v402, %v400
    %v529 = vpack.c.b16 %v403, %v401
    %v530 = vpack.c.b16 %v406, %v404
    %v531 = vpack.c.b16 %v407, %v405
    %v532 = vpack.c.b16 %v410, %v408
    %v533 = vpack.c.b16 %v411, %v409
    %v534 = vpack.c.b16 %v414, %v412
    %v535 = vpack.c.b16 %v415, %v413
    %v536 = vpack.c.b16 %v418, %v416
    %v537 = vpack.c.b16 %v419, %v417
    %v538 = vpack.c.b16 %v422, %v420
    %v539 = vpack.c.b16 %v423, %v421
    %v540 = vpack.c.b16 %v426, %v424
    %v541 = vpack.c.b16 %v427, %v425
    %v542 = vpack.c.b16 %v430, %v428
    %v543 = vpack.c.b16 %v431, %v429
    %v544 = vpack.c.b16 %v434, %v432
    %v545 = vpack.c.b16 %v435, %v433
    %v546 = vpack.c.b16 %v438, %v436
    %v547 = vpack.c.b16 %v439, %v437
    %v548 = vpack.c.b16 %v442, %v440
    %v549 = vpack.c.b16 %v443, %v441
    %v550 = vpack.c.b16 %v446, %v444
    %v551 = vpack.c.b16 %v447, %v445
    %v552 = vpack.c.b16 %v450, %v448
    %v553 = vpack.c.b16 %v451, %v449
    %v554 = vpack.c.b16 %v454, %v452
    %v555 = vpack.c.b16 %v455, %v453
    %v556 = vpack.c.b16 %v458, %v456
    %v557 = vpack.c.b16 %v459, %v457
    %vm656 = vcmask 130048
    %v658 = vsel %vm656, %v159, 0
    %660 = vmatprep.subr.bf16.mxu0 %v461
    %661 = vmatpush1.bf16.msra.mxu0 %v460
    %662 = vmatprep.subr.bf16.mxu0 %v463
    %663 = vmatpush1.bf16.msra.mxu0 %v462
    %664 = vmatprep.subr.bf16.mxu0 %v465
    %665 = vmatpush1.bf16.msra.mxu0 %v464
    %666 = vmatprep.subr.bf16.mxu0 %v467
    %667 = vmatpush1.bf16.msra.mxu0 %v466
    %668 = vmatprep.subr.bf16.mxu0 %v469
    %669 = vmatpush1.bf16.msra.mxu0 %v468
    %670 = vmatprep.subr.bf16.mxu0 %v471
    %671 = vmatpush1.bf16.msra.mxu0 %v470
    %672 = vmatprep.subr.bf16.mxu0 %v473
    %673 = vmatpush1.bf16.msra.mxu0 %v472
    %674 = vmatprep.subr.bf16.mxu0 %v475
    %675 = vmatpush1.bf16.msra.mxu0 %v474
    %676 = vmatprep.subr.bf16.mxu0 %v477
    %677 = vmatpush1.bf16.msra.mxu0 %v476
    %678 = vmatprep.subr.bf16.mxu0 %v479
    %679 = vmatpush1.bf16.msra.mxu0 %v478
    %680 = vmatprep.subr.bf16.mxu0 %v481
    %681 = vmatpush1.bf16.msra.mxu0 %v480
    %682 = vmatprep.subr.bf16.mxu0 %v483
    %683 = vmatpush1.bf16.msra.mxu0 %v482
    %684 = vmatprep.subr.bf16.mxu0 %v485
    %685 = vmatpush1.bf16.msra.mxu0 %v484
    %686 = vmatprep.subr.bf16.mxu0 %v487
    %687 = vmatpush1.bf16.msra.mxu0 %v486
    %688 = vmatprep.subr.bf16.mxu0 %v489
    %689 = vmatpush1.bf16.msra.mxu0 %v488
    %690 = vmatprep.subr.bf16.mxu0 %v491
    %691 = vmatpush1.bf16.msra.mxu0 %v490
    %692 = vmatprep.mubr.bf16.mxu0 %v154
    %693 = vmatmul.mubr.bf16.gmra.mrb[0].mxu0 %v153
    %v694 = vpop.f32.mrb[0].mxu0
    %v695 = vadd.f32 %v135, %v694
    %v696 = vpop.f32.mrb[0].mxu0
    %v697 = vadd.f32 %v139, %v696
    %v698 = vpop.f32.mrb[0].mxu0
    %v699 = vpop.f32.mrb[0].mxu0
    %700 = vdwg.mxu0
    %701 = vmatprep.subr.bf16.mxu0 %v493
    %702 = vmatpush1.bf16.msra.mxu0 %v492
    %703 = vmatprep.subr.bf16.mxu0 %v495
    %704 = vmatpush1.bf16.msra.mxu0 %v494
    %705 = vmatprep.subr.bf16.mxu0 %v497
    %706 = vmatpush1.bf16.msra.mxu0 %v496
    %707 = vmatprep.subr.bf16.mxu0 %v499
    %708 = vmatpush1.bf16.msra.mxu0 %v498
    %709 = vmatprep.subr.bf16.mxu0 %v501
    %710 = vmatpush1.bf16.msra.mxu0 %v500
    %711 = vmatprep.subr.bf16.mxu0 %v503
    %712 = vmatpush1.bf16.msra.mxu0 %v502
    %713 = vmatprep.subr.bf16.mxu0 %v505
    %714 = vmatpush1.bf16.msra.mxu0 %v504
    %715 = vmatprep.subr.bf16.mxu0 %v507
    %716 = vmatpush1.bf16.msra.mxu0 %v506
    %717 = vmatprep.subr.bf16.mxu0 %v509
    %718 = vmatpush1.bf16.msra.mxu0 %v508
    %719 = vmatprep.subr.bf16.mxu0 %v511
    %720 = vmatpush1.bf16.msra.mxu0 %v510
    %721 = vmatprep.subr.bf16.mxu0 %v513
    %722 = vmatpush1.bf16.msra.mxu0 %v512
    %723 = vmatprep.subr.bf16.mxu0 %v515
    %724 = vmatpush1.bf16.msra.mxu0 %v514
    %725 = vmatprep.subr.bf16.mxu0 %v517
    %726 = vmatpush1.bf16.msra.mxu0 %v516
    %727 = vmatprep.subr.bf16.mxu0 %v519
    %728 = vmatpush1.bf16.msra.mxu0 %v518
    %729 = vmatprep.subr.bf16.mxu0 %v521
    %730 = vmatpush1.bf16.msra.mxu0 %v520
    %731 = vmatprep.subr.bf16.mxu0 %v523
    %732 = vmatpush1.bf16.msra.mxu0 %v522
    %733 = vmatprep.mubr.bf16.mxu0 %v156
    %734 = vmatmul.mubr.bf16.gmra.mrb[0].mxu0 %v155
    %v735 = vpop.f32.mrb[0].mxu0
    %v736 = vadd.f32 %v695, %v735
    %v737 = vpop.f32.mrb[0].mxu0
    %v738 = vadd.f32 %v697, %v737
    %v739 = vpop.f32.mrb[0].mxu0
    %v740 = vpop.f32.mrb[0].mxu0
    %741 = vdwg.mxu0
    %742 = vmatprep.subr.bf16.mxu0 %v525
    %743 = vmatpush1.bf16.msra.mxu0 %v524
    %744 = vmatprep.subr.bf16.mxu0 %v527
    %745 = vmatpush1.bf16.msra.mxu0 %v526
    %746 = vmatprep.subr.bf16.mxu0 %v529
    %747 = vmatpush1.bf16.msra.mxu0 %v528
    %748 = vmatprep.subr.bf16.mxu0 %v531
    %749 = vmatpush1.bf16.msra.mxu0 %v530
    %750 = vmatprep.subr.bf16.mxu0 %v533
    %751 = vmatpush1.bf16.msra.mxu0 %v532
    %752 = vmatprep.subr.bf16.mxu0 %v535
    %753 = vmatpush1.bf16.msra.mxu0 %v534
    %754 = vmatprep.subr.bf16.mxu0 %v537
    %755 = vmatpush1.bf16.msra.mxu0 %v536
    %756 = vmatprep.subr.bf16.mxu0 %v539
    %757 = vmatpush1.bf16.msra.mxu0 %v538
    %758 = vmatprep.subr.bf16.mxu0 %v541
    %759 = vmatpush1.bf16.msra.mxu0 %v540
    %760 = vmatprep.subr.bf16.mxu0 %v543
    %761 = vmatpush1.bf16.msra.mxu0 %v542
    %762 = vmatprep.subr.bf16.mxu0 %v545
    %763 = vmatpush1.bf16.msra.mxu0 %v544
    %764 = vmatprep.subr.bf16.mxu0 %v547
    %765 = vmatpush1.bf16.msra.mxu0 %v546
    %766 = vmatprep.subr.bf16.mxu0 %v549
    %767 = vmatpush1.bf16.msra.mxu0 %v548
    %768 = vmatprep.subr.bf16.mxu0 %v551
    %769 = vmatpush1.bf16.msra.mxu0 %v550
    %770 = vmatprep.subr.bf16.mxu0 %v553
    %771 = vmatpush1.bf16.msra.mxu0 %v552
    %772 = vmatprep.subr.bf16.mxu0 %v555
    %773 = vmatpush1.bf16.msra.mxu0 %v554
    %774 = vmatprep.mubr.bf16.mxu0 %v158
    %775 = vmatmul.mubr.bf16.gmra.mrb[0].mxu0 %v157
    %v776 = vpop.f32.mrb[0].mxu0
    %v777 = vadd.f32 %v736, %v776
    %v778 = vpop.f32.mrb[0].mxu0
    %v779 = vadd.f32 %v738, %v778
    %v780 = vpop.f32.mrb[0].mxu0
    %v781 = vpop.f32.mrb[0].mxu0
    %782 = vdwg.mxu0
    %783 = vmatprep.subr.bf16.mxu0 %v557
    %784 = vmatpush1.bf16.msra.mxu0 %v556
    %785 = vmatprep.subr.bf16.mxu0 0
    %786 = vmatpush1.bf16.msra.mxu0 0
    %787 = vmatprep.subr.bf16.mxu0 0
    %788 = vmatpush1.bf16.msra.mxu0 0
    %789 = vmatprep.subr.bf16.mxu0 0
    %790 = vmatpush1.bf16.msra.mxu0 0
    %791 = vmatprep.subr.bf16.mxu0 0
    %792 = vmatpush1.bf16.msra.mxu0 0
    %793 = vmatprep.subr.bf16.mxu0 0
    %794 = vmatpush1.bf16.msra.mxu0 0
    %795 = vmatprep.subr.bf16.mxu0 0
    %796 = vmatpush1.bf16.msra.mxu0 0
    %797 = vmatprep.subr.bf16.mxu0 0
    %798 = vmatpush1.bf16.msra.mxu0 0
    %799 = vmatprep.subr.bf16.mxu0 0
    %800 = vmatpush1.bf16.msra.mxu0 0
    %801 = vmatprep.subr.bf16.mxu0 0
    %802 = vmatpush1.bf16.msra.mxu0 0
    %803 = vmatprep.subr.bf16.mxu0 0
    %804 = vmatpush1.bf16.msra.mxu0 0
    %805 = vmatprep.subr.bf16.mxu0 0
    %806 = vmatpush1.bf16.msra.mxu0 0
    %807 = vmatprep.subr.bf16.mxu0 0
    %808 = vmatpush1.bf16.msra.mxu0 0
    %809 = vmatprep.subr.bf16.mxu0 0
    %810 = vmatpush1.bf16.msra.mxu0 0
    %811 = vmatprep.subr.bf16.mxu0 0
    %812 = vmatpush1.bf16.msra.mxu0 0
    %813 = vmatprep.subr.bf16.mxu0 0
    %814 = vmatpush1.bf16.msra.mxu0 0
    %815 = vmatprep.mubr.bf16.mxu0 0
    %816 = vmatmul.mubr.bf16.gmra.mrb[0].mxu0 %v658
    %v817 = vpop.f32.mrb[0].mxu0
    %v818 = vadd.f32 %v777, %v817
    %v819 = vpop.f32.mrb[0].mxu0
    %v820 = vadd.f32 %v779, %v819
    %v821 = vpop.f32.mrb[0].mxu0
    %v822 = vpop.f32.mrb[0].mxu0
    %823 = vdwg.mxu0
    %v824 = vmax.f32 %v818, 0.0
    %v825 = vmax.f32 %v820, 0.0
    %v826 = vpack.c.bf16 %v824, %v824
    %v827 = vpack.c.bf16 %v825, %v825
    %v828 = vld [vmem:[%s3] sm:$0xff]
    %v829 = vld [vmem:[%s3 + $0x8] sm:$0xff]
    %v830 = vld [vmem:[%s3 + $0x10] sm:$0xff]
    %v831 = vld [vmem:[%s3 + $0x18] sm:$0xff]
    %v832 = vld [vmem:[%s3 + $0x20] sm:$0xff]
    %v833 = vld [vmem:[%s3 + $0x28] sm:$0xff]
    %v834 = vld [vmem:[%s3 + $0x30] sm:$0xff]
    %v835 = vld [vmem:[%s3 + $0x38] sm:$0xff]
    %v836 = vld [vmem:[%s3 + $0x40] sm:$0xff]
    %v837 = vld [vmem:[%s3 + $0x48] sm:$0xff]
    %v838 = vld [vmem:[%s3 + $0x50] sm:$0xff]
    %v839 = vld [vmem:[%s3 + $0x58] sm:$0xff]
    %v840 = vld [vmem:[%s3 + $0x60] sm:$0xff]
    %v841 = vld [vmem:[%s3 + $0x68] sm:$0xff]
    %v842 = vld [vmem:[%s3 + $0x70] sm:$0xff]
    %v843 = vld [vmem:[%s3 + $0x78] sm:$0xff]
    %v844 = vld [vmem:[%s3 + $0x80] sm:$0xff]
    %v845 = vld [vmem:[%s3 + $0x88] sm:$0xff]
    %v846 = vld [vmem:[%s3 + $0x90] sm:$0xff]
    %v847 = vld [vmem:[%s3 + $0x98] sm:$0xff]
    %v848 = vld [vmem:[%s3 + $0xa0] sm:$0xff]
    %v849 = vld [vmem:[%s3 + $0xa8] sm:$0xff]
    %v850 = vld [vmem:[%s3 + $0xb0] sm:$0xff]
    %v851 = vld [vmem:[%s3 + $0xb8] sm:$0xff]
    %v852 = vld [vmem:[%s3 + $0xc0] sm:$0xff]
    %v853 = vld [vmem:[%s4] sm:$0x3]
    %v855 = vlaneseq
    %v856 = vshrl.u32 %v855, 7
    %v857 = vsub.s32 0, %v856
    %v858 = vrot.slane %v853, %v857
    %v859 = vlaneseq
    %v860 = vshrl.u32 %v859, 7
    %v861 = vsub.s32 1, %v860
    %v862 = vrot.slane %v853, %v861
    %v890 = vunpack.c.l.b16 %v828
    %v891 = vunpack.c.h.b16 %v828
    %v892 = vunpack.c.l.b16 %v829
    %v893 = vunpack.c.h.b16 %v829
    %v894 = vunpack.c.l.b16 %v830
    %v895 = vunpack.c.h.b16 %v830
    %v896 = vunpack.c.l.b16 %v831
    %v897 = vunpack.c.h.b16 %v831
    %v898 = vunpack.c.l.b16 %v832
    %v899 = vunpack.c.h.b16 %v832
    %v900 = vunpack.c.l.b16 %v833
    %v901 = vunpack.c.h.b16 %v833
    %v902 = vunpack.c.l.b16 %v834
    %v903 = vunpack.c.h.b16 %v834
    %v904 = vunpack.c.l.b16 %v835
    %v905 = vunpack.c.h.b16 %v835
    %v906 = vunpack.c.l.b16 %v836
    %v907 = vunpack.c.h.b16 %v836
    %v908 = vunpack.c.l.b16 %v837
    %v909 = vunpack.c.h.b16 %v837
    %v910 = vunpack.c.l.b16 %v838
    %v911 = vunpack.c.h.b16 %v838
    %v912 = vunpack.c.l.b16 %v839
    %v913 = vunpack.c.h.b16 %v839
    %v914 = vunpack.c.l.b16 %v840
    %v915 = vunpack.c.h.b16 %v840
    %v916 = vunpack.c.l.b16 %v841
    %v917 = vunpack.c.h.b16 %v841
    %v918 = vunpack.c.l.b16 %v842
    %v919 = vunpack.c.h.b16 %v842
    %v920 = vunpack.c.l.b16 %v843
    %v921 = vunpack.c.h.b16 %v843
    %v922 = vunpack.c.l.b16 %v844
    %v923 = vunpack.c.h.b16 %v844
    %v924 = vunpack.c.l.b16 %v845
    %v925 = vunpack.c.h.b16 %v845
    %v926 = vunpack.c.l.b16 %v846
    %v927 = vunpack.c.h.b16 %v846
    %v928 = vunpack.c.l.b16 %v847
    %v929 = vunpack.c.h.b16 %v847
    %v930 = vunpack.c.l.b16 %v848
    %v931 = vunpack.c.h.b16 %v848
    %v932 = vunpack.c.l.b16 %v849
    %v933 = vunpack.c.h.b16 %v849
    %v934 = vunpack.c.l.b16 %v850
    %v935 = vunpack.c.h.b16 %v850
    %v936 = vunpack.c.l.b16 %v851
    %v937 = vunpack.c.h.b16 %v851
    %v938 = vunpack.c.l.b16 %v852
    %v939 = vunpack.c.h.b16 %v852
    %v940 = vpack.c.b16 %v892, %v890
    %v941 = vpack.c.b16 %v893, %v891
    %v942 = vpack.c.b16 %v896, %v894
    %v943 = vpack.c.b16 %v897, %v895
    %v944 = vpack.c.b16 %v900, %v898
    %v945 = vpack.c.b16 %v901, %v899
    %v946 = vpack.c.b16 %v904, %v902
    %v947 = vpack.c.b16 %v905, %v903
    %v948 = vpack.c.b16 %v908, %v906
    %v949 = vpack.c.b16 %v909, %v907
    %v950 = vpack.c.b16 %v912, %v910
    %v951 = vpack.c.b16 %v913, %v911
    %v952 = vpack.c.b16 %v916, %v914
    %v953 = vpack.c.b16 %v917, %v915
    %v954 = vpack.c.b16 %v920, %v918
    %v955 = vpack.c.b16 %v921, %v919
    %v956 = vpack.c.b16 %v924, %v922
    %v957 = vpack.c.b16 %v925, %v923
    %v958 = vpack.c.b16 %v928, %v926
    %v959 = vpack.c.b16 %v929, %v927
    %v960 = vpack.c.b16 %v932, %v930
    %v961 = vpack.c.b16 %v933, %v931
    %v962 = vpack.c.b16 %v936, %v934
    %v963 = vpack.c.b16 %v937, %v935
    %v964 = vpack.c.b16 %v938, %v938
    %v965 = vpack.c.b16 %v939, %v939
    %vm990 = vcmask 588800
    %v992 = vsel %vm990, %v827, 0
    %vm994 = vcmask 1043456
    %v996 = vsel %vm994, %v964, 0
    %v999 = vsel %vm994, %v965, 0
    %1001 = vmatprep.subr.bf16.mxu0 %v941
    %1002 = vmatpush1.bf16.msra.mxu0 %v940
    %1003 = vmatprep.subr.bf16.mxu0 %v943
    %1004 = vmatpush1.bf16.msra.mxu0 %v942
    %1005 = vmatprep.subr.bf16.mxu0 %v945
    %1006 = vmatpush1.bf16.msra.mxu0 %v944
    %1007 = vmatprep.subr.bf16.mxu0 %v947
    %1008 = vmatpush1.bf16.msra.mxu0 %v946
    %1009 = vmatprep.subr.bf16.mxu0 %v949
    %1010 = vmatpush1.bf16.msra.mxu0 %v948
    %1011 = vmatprep.subr.bf16.mxu0 %v951
    %1012 = vmatpush1.bf16.msra.mxu0 %v950
    %1013 = vmatprep.subr.bf16.mxu0 %v953
    %1014 = vmatpush1.bf16.msra.mxu0 %v952
    %1015 = vmatprep.subr.bf16.mxu0 %v955
    %1016 = vmatpush1.bf16.msra.mxu0 %v954
    %1017 = vmatprep.subr.bf16.mxu0 %v957
    %1018 = vmatpush1.bf16.msra.mxu0 %v956
    %1019 = vmatprep.subr.bf16.mxu0 %v959
    %1020 = vmatpush1.bf16.msra.mxu0 %v958
    %1021 = vmatprep.subr.bf16.mxu0 %v961
    %1022 = vmatpush1.bf16.msra.mxu0 %v960
    %1023 = vmatprep.subr.bf16.mxu0 %v963
    %1024 = vmatpush1.bf16.msra.mxu0 %v962
    %1025 = vmatprep.subr.bf16.mxu0 %v999
    %1026 = vmatpush1.bf16.msra.mxu0 %v996
    %1027 = vmatprep.subr.bf16.mxu0 0
    %1028 = vmatpush1.bf16.msra.mxu0 0
    %1029 = vmatprep.subr.bf16.mxu0 0
    %1030 = vmatpush1.bf16.msra.mxu0 0
    %1031 = vmatprep.subr.bf16.mxu0 0
    %1032 = vmatpush1.bf16.msra.mxu0 0
    %1033 = vmatprep.mubr.bf16.mxu0 %v992
    %1034 = vmatmul.mubr.bf16.gmra.mrb[0].mxu0 %v826
    %v1035 = vpop.f32.mrb[0].mxu0
    %v1036 = vadd.f32 %v858, %v1035
    %v1037 = vpop.f32.mrb[0].mxu0
    %v1038 = vadd.f32 %v862, %v1037
    %v1039 = vpop.f32.mrb[0].mxu0
    %v1040 = vpop.f32.mrb[0].mxu0
    %1041 = vdwg.mxu0
    %v1042 = vmax.f32 %v1036, 0.0
    %v1043 = vmax.f32 %v1038, 0.0
    %v1044 = vpack.c.bf16 %v1042, %v1042
    %v1045 = vpack.c.bf16 %v1043, %v1043
    %v1046 = vld [vmem:[%s5] sm:$0xf]
    %v1047 = vld [vmem:[%s5 + $0x4] sm:$0xf]
    %v1048 = vld [vmem:[%s5 + $0x8] sm:$0xf]
    %v1049 = vld [vmem:[%s5 + $0xc] sm:$0xf]
    %v1050 = vld [vmem:[%s5 + $0x10] sm:$0xf]
    %v1051 = vld [vmem:[%s5 + $0x14] sm:$0xf]
    %v1052 = vld [vmem:[%s5 + $0x18] sm:$0xf]
    %v1053 = vld [vmem:[%s5 + $0x1c] sm:$0xf]
    %v1054 = vld [vmem:[%s5 + $0x20] sm:$0xf]
    %v1055 = vld [vmem:[%s5 + $0x24] sm:$0xf]
    %v1056 = vld [vmem:[%s5 + $0x28] sm:$0xf]
    %v1057 = vld [vmem:[%s5 + $0x2c] sm:$0xf]
    %v1058 = vld [vmem:[%s5 + $0x30] sm:$0xf]
    %v1059 = vld [vmem:[%s5 + $0x34] sm:$0xf]
    %v1060 = vld [vmem:[%s5 + $0x38] sm:$0xf]
    %v1061 = vld [vmem:[%s5 + $0x3c] sm:$0xf]
    %v1062 = vld [vmem:[%s5 + $0x40] sm:$0xf]
    %v1063 = vld [vmem:[%s5 + $0x44] sm:$0xf]
    %v1064 = vld [vmem:[%s5 + $0x48] sm:$0xf]
    %v1065 = vld [vmem:[%s5 + $0x4c] sm:$0xf]
    %v1066 = vld [vmem:[%s5 + $0x50] sm:$0xf]
    %v1067 = vld [vmem:[%s5 + $0x54] sm:$0xf]
    %v1068 = vld [vmem:[%s5 + $0x58] sm:$0xf]
    %v1069 = vld [vmem:[%s5 + $0x5c] sm:$0xf]
    %v1070 = vld [vmem:[%s5 + $0x60] sm:$0xf]
    %v1071 = vld [vmem:[%s6] sm:$0x1]
    %v1073 = vlaneseq
    %v1074 = vshrl.u32 %v1073, 7
    %v1075 = vsub.s32 0, %v1074
    %v1076 = vrot.slane %v1071, %v1075
    %v1103 = vunpack.c.l.b16 %v1046
    %v1104 = vunpack.c.l.b16 %v1047
    %v1105 = vunpack.c.l.b16 %v1048
    %v1106 = vunpack.c.l.b16 %v1049
    %v1107 = vunpack.c.l.b16 %v1050
    %v1108 = vunpack.c.l.b16 %v1051
    %v1109 = vunpack.c.l.b16 %v1052
    %v1110 = vunpack.c.l.b16 %v1053
    %v1111 = vunpack.c.l.b16 %v1054
    %v1112 = vunpack.c.l.b16 %v1055
    %v1113 = vunpack.c.l.b16 %v1056
    %v1114 = vunpack.c.l.b16 %v1057
    %v1115 = vunpack.c.l.b16 %v1058
    %v1116 = vunpack.c.l.b16 %v1059
    %v1117 = vunpack.c.l.b16 %v1060
    %v1118 = vunpack.c.l.b16 %v1061
    %v1119 = vunpack.c.l.b16 %v1062
    %v1120 = vunpack.c.l.b16 %v1063
    %v1121 = vunpack.c.l.b16 %v1064
    %v1122 = vunpack.c.l.b16 %v1065
    %v1123 = vunpack.c.l.b16 %v1066
    %v1124 = vunpack.c.l.b16 %v1067
    %v1125 = vunpack.c.l.b16 %v1068
    %v1126 = vunpack.c.l.b16 %v1069
    %v1127 = vunpack.c.l.b16 %v1070
    %v1128 = vpack.c.b16 %v1104, %v1103
    %v1129 = vpack.c.b16 %v1106, %v1105
    %v1130 = vpack.c.b16 %v1108, %v1107
    %v1131 = vpack.c.b16 %v1110, %v1109
    %v1132 = vpack.c.b16 %v1112, %v1111
    %v1133 = vpack.c.b16 %v1114, %v1113
    %v1134 = vpack.c.b16 %v1116, %v1115
    %v1135 = vpack.c.b16 %v1118, %v1117
    %v1136 = vpack.c.b16 %v1120, %v1119
    %v1137 = vpack.c.b16 %v1122, %v1121
    %v1138 = vpack.c.b16 %v1124, %v1123
    %v1139 = vpack.c.b16 %v1126, %v1125
    %v1140 = vpack.c.b16 %v1127, %v1127
    %v1154 = vsel %vm990, %v1045, 0
    %v1157 = vsel %vm994, %v1140, 0
    %1159 = vmatprep.subr.bf16.mxu0 0
    %1160 = vmatpush1.bf16.msra.mxu0 %v1128
    %1161 = vmatprep.subr.bf16.mxu0 0
    %1162 = vmatpush1.bf16.msra.mxu0 %v1129
    %1163 = vmatprep.subr.bf16.mxu0 0
    %1164 = vmatpush1.bf16.msra.mxu0 %v1130
    %1165 = vmatprep.subr.bf16.mxu0 0
    %1166 = vmatpush1.bf16.msra.mxu0 %v1131
    %1167 = vmatprep.subr.bf16.mxu0 0
    %1168 = vmatpush1.bf16.msra.mxu0 %v1132
    %1169 = vmatprep.subr.bf16.mxu0 0
    %1170 = vmatpush1.bf16.msra.mxu0 %v1133
    %1171 = vmatprep.subr.bf16.mxu0 0
    %1172 = vmatpush1.bf16.msra.mxu0 %v1134
    %1173 = vmatprep.subr.bf16.mxu0 0
    %1174 = vmatpush1.bf16.msra.mxu0 %v1135
    %1175 = vmatprep.subr.bf16.mxu0 0
    %1176 = vmatpush1.bf16.msra.mxu0 %v1136
    %1177 = vmatprep.subr.bf16.mxu0 0
    %1178 = vmatpush1.bf16.msra.mxu0 %v1137
    %1179 = vmatprep.subr.bf16.mxu0 0
    %1180 = vmatpush1.bf16.msra.mxu0 %v1138
    %1181 = vmatprep.subr.bf16.mxu0 0
    %1182 = vmatpush1.bf16.msra.mxu0 %v1139
    %1183 = vmatprep.subr.bf16.mxu0 0
    %1184 = vmatpush1.bf16.msra.mxu0 %v1157
    %1185 = vmatprep.subr.bf16.mxu0 0
    %1186 = vmatpush1.bf16.msra.mxu0 0
    %1187 = vmatprep.subr.bf16.mxu0 0
    %1188 = vmatpush1.bf16.msra.mxu0 0
    %1189 = vmatprep.subr.bf16.mxu0 0
    %1190 = vmatpush1.bf16.msra.mxu0 0
    %1191 = vmatprep.mubr.bf16.mxu0 %v1154
    %1192 = vmatmul.mubr.bf16.gmra.mrb[0].mxu0 %v1044
    %v1193 = vpop.f32.mrb[0].mxu0
    %v1194 = vadd.f32 %v1076, %v1193
    %v1195 = vpop.f32.mrb[0].mxu0
    %v1196 = vpop.f32.mrb[0].mxu0
    %v1197 = vpop.f32.mrb[0].mxu0
    %1198 = vdwg.mxu0
    %1199 = vst [vmem:[#allocation2] sm:$0xff] %v1194
    // Predicated region
    $region30: #{tpu_custom_call.1} parent=1 // pred_check
      _
    $region31: #{tpu_custom_call.1} parent=1 // pred_check_branch
      %1201 = sbr.rel (0) target = $region33
    $region32: #{tpu_custom_call.1} parent=1 // pred_region
      %s1203 = ssub.s32 128, 128
      %1204 = vsyncadd [#allocation3], %s1203
      %s1206 = sshll.u32 [#allocation2], 4
      %s1207 = int_to_ptr.vmem [resolvable:$true] %s1206
      %1209 = dma.vmem_to_hbm [thread:$0]  %s1207, 128, %s7, [#allocation3]
    $region33: #{tpu_custom_call.1} parent=1 // pred_fallthru
      _
    // Predicated region
    $region34: #{tpu_custom_call.1} parent=1 // pred_check
      _
    $region35: #{tpu_custom_call.1} parent=1 // pred_check_branch
      %1211 = sbr.rel (0) target = $region37
    $region36: #{tpu_custom_call.1} parent=1 // pred_region
      %1212 = dma.done [#allocation3], 128
    $region37: #{tpu_custom_call.1} parent=1 // pred_fallthru
      _
    %1213 = vsyncpa [#allocation3], 1

</llo_original>
